<compile_context>
chip_gen: v5e
topology: v5e:2x2
jax: 0.10.0
libtpu: 0.0.40
codegen_flags: <defaults>
</compile_context>

<pallas_src>
import jax
import jax.numpy as jnp
from jax.experimental import pallas as pl
from jax.experimental.pallas import tpu as pltpu


def ensemble_kernel(x_ref, w_ref, o_ref):
    # x_ref: (TILE_B, num_models) f32 in VMEM  -- one batch tile
    # w_ref: (1, num_models)      f32 in VMEM  -- resident across the whole grid
    # o_ref: (TILE_B, 1)          f32 in VMEM
    #
    # VPU path: broadcast the single weight row across sublanes, multiply,
    # reduce over the (tiny) num_models lane axis.  No MXU, no transpose.
    x = x_ref[...]
    w = w_ref[...]
    o_ref[...] = jnp.sum(x * w, axis=-1, keepdims=True).astype(o_ref.dtype)


def ensemble_forward(model_outputs, weight, *, tile_b=1024):
    """model_outputs: (B, num_models) f32; weight: (1, num_models) f32 -> (B, 1) f32."""
    B, M = model_outputs.shape
    assert weight.shape == (1, M), weight.shape

    # Block second-minor dim must be a multiple of 8 or equal to the full dim.
    # tile_b (default 1024) is a multiple of 8; for small B just take the whole
    # array as one block.  Non-divisible B is handled by Pallas' padded last block
    # (per-row compute, so padded rows never contaminate valid outputs).
    tb = tile_b if B > tile_b else B
    grid = (pl.cdiv(B, tb),)

    return pl.pallas_call(
        ensemble_kernel,
        out_shape=jax.ShapeDtypeStruct((B, 1), model_outputs.dtype),
        grid=grid,
        in_specs=[
            # Batch tile streamed from HBM, double-buffered by the auto-pipeline.
            pl.BlockSpec((tb, M), lambda i: (i, 0)),
            # Weight: constant block index -> fetched once, stays resident.
            pl.BlockSpec((1, M), lambda i: (0, 0)),
        ],
        out_specs=pl.BlockSpec((tb, 1), lambda i: (i, 0)),
        compiler_params=pltpu.CompilerParams(
            # Independent batch tiles: lets the two TensorCores on v7x (and
            # megacore parts in general) split the grid.
            dimension_semantics=("parallel",),
        ),
    )(model_outputs, weight)


if __name__ == "__main__":
    num_models = 4
    batch = 8

    # Deterministic parameter init, exactly as the PyTorch module:
    #   self.coefficients.weight.data.fill_(1.0 / num_models)
    weight = jnp.full((1, num_models), 1.0 / num_models, dtype=jnp.float32)

    key = jax.random.PRNGKey(0)
    model_outputs = jax.random.normal(key, (batch, num_models), dtype=jnp.float32)

    # Small-shape check (single block, grid=(1,)).
    out = jax.block_until_ready(ensemble_forward(model_outputs, weight))
    ref = model_outputs @ weight.T
    assert out.shape == (batch, 1)
    assert jnp.allclose(out, ref, atol=1e-5, rtol=1e-5)

    # Larger batch to exercise the tiled / pipelined path (grid=(4,), TILE_B=1024).
    big_batch = 4096
    big_inputs = jax.random.normal(
        jax.random.PRNGKey(1), (big_batch, num_models), dtype=jnp.float32)
    big_out = jax.block_until_ready(ensemble_forward(big_inputs, weight))
    big_ref = big_inputs @ weight.T
    assert big_out.shape == (big_batch, 1)
    assert jnp.allclose(big_out, big_ref, atol=1e-5, rtol=1e-5)

    print("KERNEL_OK")
</pallas_src>

<mosaic_0001>
module attributes {stable_mosaic.version = 11 : i64} {
  func.func @ensemble_kernel(%arg0: i32, %arg1: memref<8x4xf32, #tpu.memory_space<vmem>>, %arg2: memref<1x4xf32, #tpu.memory_space<vmem>>, %arg3: memref<8x1xf32, #tpu.memory_space<vmem>>) attributes {dimension_semantics = [#tpu.dimension_semantics<parallel>], iteration_bounds = array<i64: 1>, scalar_prefetch = 0 : i64, scratch_operands = 0 : i64, tpu.core_type = #tpu.core_type<tc>, window_params = [{transform_indices = @transform_0, window_bounds = array<i64: 8, 4>}, {pipeline_mode = #tpu.pipeline_mode<synchronous>, transform_indices = @transform_1, window_bounds = array<i64: 1, 4>}, {transform_indices = @transform_2, window_bounds = array<i64: 8, 1>}]} {
    %c0 = arith.constant 0 : index
    %c0_0 = arith.constant 0 : index
    %0 = vector.load %arg1[%c0, %c0_0] : memref<8x4xf32, #tpu.memory_space<vmem>>, vector<8x4xf32>
    %c0_1 = arith.constant 0 : index
    %c0_2 = arith.constant 0 : index
    %1 = vector.load %arg2[%c0_1, %c0_2] : memref<1x4xf32, #tpu.memory_space<vmem>>, vector<1x4xf32>
    %2 = vector.broadcast %1 : vector<1x4xf32> to vector<8x4xf32>
    %3 = arith.mulf %0, %2 : vector<8x4xf32>
    %cst = arith.constant dense<0.000000e+00> : vector<8xf32>
    %4 = vector.multi_reduction <add>, %3, %cst [1] : vector<8x4xf32> to vector<8xf32>
    %5 = vector.shape_cast %4 : vector<8xf32> to vector<8x1xf32>
    %c0_3 = arith.constant 0 : index
    %c0_4 = arith.constant 0 : index
    %6 = vector.load %arg3[%c0_3, %c0_4] : memref<8x1xf32, #tpu.memory_space<vmem>>, vector<8x1xf32>
    tpu.vector_store %arg3[%c0_3, %c0_4], %5 {strides = array<i32>} : memref<8x1xf32, #tpu.memory_space<vmem>>, vector<8x1xf32>,
    return
  }
  func.func @transform_0(%arg0: i32) -> (i32, i32) {
    %c0_i32 = arith.constant 0 : i32
    %c0_i32_0 = arith.constant 0 : i32
    return %arg0, %c0_i32 : i32, i32
  }
  func.func @transform_1(%arg0: i32) -> (i32, i32) {
    %c0_i32 = arith.constant 0 : i32
    %c0_i32_0 = arith.constant 0 : i32
    %c0_i32_1 = arith.constant 0 : i32
    return %c0_i32, %c0_i32_0 : i32, i32
  }
  func.func @transform_2(%arg0: i32) -> (i32, i32) {
    %c0_i32 = arith.constant 0 : i32
    %c0_i32_0 = arith.constant 0 : i32
    return %arg0, %c0_i32 : i32, i32
  }
}

</mosaic_0001>

<llo_original>
// kernel: tpu_custom_call.1
$region0: #{tpu_custom_call.1}
  #allocation0 [shape = 'u32[]', space=smem, size = 0x4, offset = 0x4, fixed_abs, tag = 'smem constant byte address 0x4 - core index']
  #allocation1 [shape = 'u32[72,128]{1,0:T(1,128)}', space=vmem, size = 0x9000, scoped, tag = 'internal scratch']
  %s0 = inlined_call_operand.vmem [shape: f32[8,4], index: 0, kind: input, shape index: {}]
  %s1 = inlined_call_operand.vmem [shape: f32[1,4], index: 1, kind: input, shape index: {}]
  %s2 = inlined_call_operand.vmem [shape: f32[8,1], index: 2, kind: output, shape index: {}]
  %s3 = sld [smem:[#allocation0]]
  $region18: #{tpu_custom_call.1} parent=0
    _
  %s5 = ssub.s32 1, %s3
  %s6 = scalar_select 0, %s5, %s3
  // Predicated region
  $region2: #{tpu_custom_call.1} parent=0 // pred_check
    _
  $region3: #{tpu_custom_call.1} parent=0 // pred_check_branch
    %8 = sbr.rel (0) target = $region5
  $region4: #{tpu_custom_call.1} parent=0 // pred_region
    _
  $region5: #{tpu_custom_call.1} parent=0 // pred_fallthru
    _
  // Predicated region
  $region6: #{tpu_custom_call.1} parent=0 // pred_check
    _
  $region7: #{tpu_custom_call.1} parent=0 // pred_check_branch
    %10 = sbr.rel (0) target = $region9
  $region8: #{tpu_custom_call.1} parent=0 // pred_region
    _
  $region9: #{tpu_custom_call.1} parent=0 // pred_fallthru
    _
  %v11 = vld [vmem:[%s0] sm:$0xff]
  %v12 = vld [vmem:[%s1] sm:$0x1]
  %v14 = vperm.slane %v12, 0
  %v16 = vmul.f32 %v11, %v14
  %vm17 = vcmask 31744
  %v18 = vsel %vm17, %v16, 0.0
  %19 = vadd.xlane.f32.xlu0 %v18
  %v20 = vpop.xlane.xlu0 %19
  %vm21 = vcmask 7168
  %22 = vst.msk [vmem:[%s2] sm:$0xff] %vm21, %v20
  // Predicated region
  $region10: #{tpu_custom_call.1} parent=0 // pred_check
    _
  $region11: #{tpu_custom_call.1} parent=0 // pred_check_branch
    %24 = sbr.rel (0) target = $region13
  $region12: #{tpu_custom_call.1} parent=0 // pred_region
    _
  $region13: #{tpu_custom_call.1} parent=0 // pred_fallthru
    _
  // Predicated region
  $region14: #{tpu_custom_call.1} parent=0 // pred_check
    _
  $region15: #{tpu_custom_call.1} parent=0 // pred_check_branch
    %26 = sbr.rel (0) target = $region17
  $region16: #{tpu_custom_call.1} parent=0 // pred_region
    _
  $region17: #{tpu_custom_call.1} parent=0 // pred_fallthru
    _

</llo_original>
